<compile_context>
chip_gen: v6e
topology: v6e:2x2x1
jax: 0.10.0
libtpu: 0.0.40
codegen_flags: <defaults>
</compile_context>

<pallas_src>
from functools import partial

import jax
import jax.numpy as jnp
from jax.experimental import pallas as pl
from jax.experimental.pallas import tpu as pltpu


def _round_up(v, m):
    return (v + m - 1) // m * m


def _cdiv(a, b):
    return -(-a // b)


def _dfl_kernel(w_ref, x_ref, o_ref, *, use_mxu):
    # x_ref: (4, c1, TA) native dtype -- one (batch, anchor-tile)
    # o_ref: (4, TA)     output in input dtype
    # w_ref: (2, c1) rows [w, ones]   (MXU path)   or
    #        (c1, TA) lane-dense weights            (VPU path)
    x = x_ref[...].astype(jnp.float32)            # in-kernel cast (VPU)
    m = jnp.max(x, axis=1, keepdims=True)         # (4, 1, TA) sublane reduce (XLU)
    e = jnp.exp(x - m)                            # (4, c1, TA) EUP

    if use_mxu:
        # num/den via the idle MXU: (2, c1) @ (c1, TA) -> (2, TA) per box side.
        rows = []
        for j in range(4):
            nd = jnp.dot(w_ref[...], e[j],
                         preferred_element_type=jnp.float32)    # (2, TA)
            num = nd[0:1, :]
            den = nd[1:2, :]
            rows.append(num * pl.reciprocal(den, approx=True))  # EUP vrcp
        o_ref[...] = jnp.concatenate(rows, axis=0).astype(o_ref.dtype)
    else:
        # HBM-bound f32 path: fused normalization, exact divide.
        den = jnp.sum(e, axis=1)                                 # (4, TA)
        num = jnp.sum(e * w_ref[...][None, :, :], axis=1)        # (4, TA)
        o_ref[...] = (num / den).astype(o_ref.dtype)


def dfl_forward(x, w, c1=16, anchor_tile=None):
    """DFL forward.

    x: (b, 4*c1, a) float array (any float dtype; consumed natively)
    w: (c1,) conv weights (1x1 Conv2d(c1 -> 1, bias=False))
    returns: (b, 4, a) in x.dtype
    """
    b, ch, a = x.shape
    assert ch == 4 * c1, f"expected {4 * c1} channels, got {ch}"

    # Same memory view as torch .view(b, 4, c1, a); keep native dtype, no pad.
    x4 = x.reshape(b, 4, c1, a)

    # Tile selection: ~2 anchor steps when b == 1 (dual-TC sharding on v7x),
    # one anchor step per batch otherwise; multiple of 128 lanes; VMEM-capped.
    if anchor_tile is None:
        n_target = 2 if b == 1 else 1
        ta = _round_up(_cdiv(a, n_target), 128)
    else:
        ta = _round_up(int(anchor_tile), 128)
    ta = max(128, min(ta, 8192, _round_up(a, 128)))

    n_a = _cdiv(a, ta)          # ragged last block handled by Pallas masking
    grid = (b, n_a)

    use_mxu = (x.dtype == jnp.bfloat16)
    if use_mxu:
        # Tiny (2, c1) matrix [w; ones] -> num/den via MXU in-kernel.
        w_arr = jnp.stack(
            [w.astype(jnp.float32), jnp.ones((c1,), jnp.float32)], axis=0)
        w_spec = pl.BlockSpec((2, c1), lambda i, j: (0, 0))
    else:
        # Lane-dense (c1, ta) weights; constant index_map -> resident.
        w_arr = jnp.broadcast_to(w.astype(jnp.float32).reshape(c1, 1), (c1, ta))
        w_spec = pl.BlockSpec((c1, ta), lambda i, j: (0, 0))

    itemsize = jnp.dtype(x.dtype).itemsize
    cost = pl.CostEstimate(
        flops=int(6 * b * 4 * c1 * a),
        transcendentals=int(b * 4 * c1 * a),
        bytes_accessed=int(b * 4 * c1 * a * itemsize + b * 4 * a * itemsize),
    )

    out = pl.pallas_call(
        partial(_dfl_kernel, use_mxu=use_mxu),
        out_shape=jax.ShapeDtypeStruct((b, 4, a), x.dtype),
        grid_spec=pltpu.PrefetchScalarGridSpec(
            num_scalar_prefetch=0,
            grid=grid,
            in_specs=[
                w_spec,
                pl.BlockSpec((None, 4, c1, ta), lambda i, j: (i, 0, 0, j)),
            ],
            out_specs=pl.BlockSpec((None, 4, ta), lambda i, j: (i, 0, j)),
        ),
        compiler_params=pltpu.CompilerParams(
            dimension_semantics=("parallel", "parallel"),
        ),
        cost_estimate=cost,
    )(w_arr, x4)
    return out


def dfl_reference(x, w, c1=16):
    b, ch, a = x.shape
    x4 = x.reshape(b, 4, c1, a).astype(jnp.float32)
    p = jax.nn.softmax(x4, axis=2)
    return jnp.einsum("bjka,k->bja", p, w.astype(jnp.float32))


if __name__ == "__main__":
    c1 = 16
    key = jax.random.PRNGKey(0)

    # Standard DFL initialization of the 1x1 conv: arange(c1).
    w = jnp.arange(c1, dtype=jnp.float32)

    # f32 path, multi-tile grid (exact divide, VPU/XLU reductions).
    b, a = 2, 512
    x = jax.random.normal(key, (b, 4 * c1, a), dtype=jnp.float32)
    out = jax.block_until_ready(dfl_forward(x, w, c1=c1, anchor_tile=256))
    ref = dfl_reference(x, w, c1=c1)
    assert out.shape == (b, 4, a)
    assert jnp.allclose(out, ref, atol=1e-4, rtol=1e-4), "f32 mismatch vs reference"

    # bf16 path: native dtype in, MXU num/den + approx reciprocal in-kernel.
    xb = x.astype(jnp.bfloat16)
    outb = jax.block_until_ready(dfl_forward(xb, w, c1=c1, anchor_tile=256))
    refb = dfl_reference(xb.astype(jnp.float32), w, c1=c1)
    assert outb.dtype == jnp.bfloat16
    assert jnp.allclose(outb.astype(jnp.float32), refb, atol=1e-1, rtol=1e-2), "bf16 mismatch"

    # Ragged anchor count (like YOLO's a=8400, not a multiple of 128):
    # no wrapper pad -- the last block is masked on writeback. Check no NaN leak.
    a2 = 200
    x2 = jax.random.normal(jax.random.PRNGKey(1), (1, 4 * c1, a2), dtype=jnp.float32)
    out2 = jax.block_until_ready(dfl_forward(x2, w, c1=c1))
    ref2 = dfl_reference(x2, w, c1=c1)
    assert out2.shape == (1, 4, a2)
    assert not bool(jnp.any(jnp.isnan(out2))), "NaN leaked from ragged edge (f32)"
    assert jnp.allclose(out2, ref2, atol=1e-4, rtol=1e-4), "ragged-anchor f32 mismatch"

    # Ragged + bf16 (MXU path + masked edge block).
    x2b = x2.astype(jnp.bfloat16)
    out2b = jax.block_until_ready(dfl_forward(x2b, w, c1=c1))
    ref2b = dfl_reference(x2b.astype(jnp.float32), w, c1=c1)
    assert out2b.dtype == jnp.bfloat16
    assert not bool(jnp.any(jnp.isnan(out2b.astype(jnp.float32)))), "NaN leaked (bf16)"
    assert jnp.allclose(out2b.astype(jnp.float32), ref2b, atol=1e-1, rtol=1e-2), \
        "ragged-anchor bf16 mismatch"

    print("KERNEL_OK")
</pallas_src>

<mosaic_0001>
module attributes {stable_mosaic.version = 11 : i64} {
  func.func @_dfl_kernel(%arg0: i32, %arg1: i32, %arg2: memref<16x256xf32, #tpu.memory_space<vmem>>, %arg3: memref<1x4x16x256xf32, #tpu.memory_space<vmem>>, %arg4: memref<1x4x256xf32, #tpu.memory_space<vmem>>) attributes {dimension_semantics = [#tpu.dimension_semantics<parallel>, #tpu.dimension_semantics<parallel>], iteration_bounds = array<i64: 2, 2>, scalar_prefetch = 0 : i64, scratch_operands = 0 : i64, tpu.core_type = #tpu.core_type<tc>, window_params = [{pipeline_mode = #tpu.pipeline_mode<synchronous>, transform_indices = @transform_0, window_bounds = array<i64: 16, 256>}, {transform_indices = @transform_1, window_bounds = array<i64: 1, 4, 16, 256>}, {transform_indices = @transform_2, window_bounds = array<i64: 1, 4, 256>}]} {
    %c0 = arith.constant 0 : index
    %c0_0 = arith.constant 0 : index
    %c0_1 = arith.constant 0 : index
    %c0_2 = arith.constant 0 : index
    %0 = vector.load %arg3[%c0, %c0_0, %c0_1, %c0_2] : memref<1x4x16x256xf32, #tpu.memory_space<vmem>>, vector<1x4x16x256xf32>
    %1 = vector.shape_cast %0 : vector<1x4x16x256xf32> to vector<4x16x256xf32>
    %cst = arith.constant dense<0xFF800000> : vector<4x256xf32>
    %2 = vector.multi_reduction <maximumf>, %1, %cst [1] : vector<4x16x256xf32> to vector<4x256xf32>
    %3 = vector.shape_cast %2 : vector<4x256xf32> to vector<4x1x256xf32>
    %4 = vector.broadcast %3 : vector<4x1x256xf32> to vector<4x16x256xf32>
    %5 = arith.subf %1, %4 : vector<4x16x256xf32>
    %6 = math.exp %5 : vector<4x16x256xf32>
    %cst_3 = arith.constant dense<0.000000e+00> : vector<4x256xf32>
    %7 = vector.multi_reduction <add>, %6, %cst_3 [1] : vector<4x16x256xf32> to vector<4x256xf32>
    %c0_4 = arith.constant 0 : index
    %c0_5 = arith.constant 0 : index
    %8 = vector.load %arg2[%c0_4, %c0_5] : memref<16x256xf32, #tpu.memory_space<vmem>>, vector<16x256xf32>
    %9 = vector.shape_cast %8 : vector<16x256xf32> to vector<1x16x256xf32>
    %10 = vector.broadcast %9 : vector<1x16x256xf32> to vector<4x16x256xf32>
    %11 = arith.mulf %6, %10 : vector<4x16x256xf32>
    %cst_6 = arith.constant dense<0.000000e+00> : vector<4x256xf32>
    %12 = vector.multi_reduction <add>, %11, %cst_6 [1] : vector<4x16x256xf32> to vector<4x256xf32>
    %13 = arith.divf %12, %7 : vector<4x256xf32>
    %c0_7 = arith.constant 0 : index
    %c0_8 = arith.constant 0 : index
    %c0_9 = arith.constant 0 : index
    %14 = vector.load %arg4[%c0_7, %c0_8, %c0_9] : memref<1x4x256xf32, #tpu.memory_space<vmem>>, vector<1x4x256xf32>
    %15 = vector.shape_cast %14 : vector<1x4x256xf32> to vector<4x256xf32>
    %16 = vector.shape_cast %13 : vector<4x256xf32> to vector<1x4x256xf32>
    tpu.vector_store %arg4[%c0_7, %c0_8, %c0_9], %16 {strides = array<i32>} : memref<1x4x256xf32, #tpu.memory_space<vmem>>, vector<1x4x256xf32>,
    return
  }
  func.func @transform_0(%arg0: i32, %arg1: i32) -> (i32, i32) {
    %c0_i32 = arith.constant 0 : i32
    %c0_i32_0 = arith.constant 0 : i32
    %c0_i32_1 = arith.constant 0 : i32
    return %c0_i32, %c0_i32_0 : i32, i32
  }
  func.func @transform_1(%arg0: i32, %arg1: i32) -> (i32, i32, i32, i32) {
    %c0_i32 = arith.constant 0 : i32
    %c0_i32_0 = arith.constant 0 : i32
    %c0_i32_1 = arith.constant 0 : i32
    return %arg0, %c0_i32, %c0_i32_0, %arg1 : i32, i32, i32, i32
  }
  func.func @transform_2(%arg0: i32, %arg1: i32) -> (i32, i32, i32) {
    %c0_i32 = arith.constant 0 : i32
    %c0_i32_0 = arith.constant 0 : i32
    return %arg0, %c0_i32, %arg1 : i32, i32, i32
  }
}

</mosaic_0001>

<llo_original>
// kernel: tpu_custom_call.1
$region0: #{tpu_custom_call.1}
  #allocation0 [shape = 'u32[]', space=smem, size = 0x4, offset = 0x4, fixed_abs, tag = 'smem constant byte address 0x4 - core index']
  #allocation1 [shape = 'u32[144,128]{1,0:T(1,128)}', space=vmem, size = 0x12000, scoped, tag = 'internal scratch']
  %s0 = inlined_call_operand.hbm [shape: f32[16,256], index: 0, kind: input, shape index: {}]
  %s1 = inlined_call_operand.hbm [shape: f32[2,4,16,512], index: 1, kind: input, shape index: {}]
  %s2 = inlined_call_operand.hbm [shape: f32[2,4,512], index: 2, kind: output, shape index: {}]
  %s3 = sld [smem:[#allocation0]]
  $region49: #{tpu_custom_call.1} parent=0
    _
  %s5 = ssub.s32 1, %s3
  %s6 = scalar_select 0, %s5, %s3
  $region1: #{tpu_custom_call.1} parent=0
    #allocation2 [shape = 'u8[16384]{0}', space=vmem, size = 0x4000, scoped, tag = 'input window, operand 0, single buffered']
    #allocation3 [shape = 's32[2]{0}', space=sflag, size = 0x8, scoped, tag = 'scoped memory for tpu_custom_call.1']
    #allocation4 [shape = 's32[2]{0}', space=sflag, size = 0x8, scoped, tag = 'scoped memory for tpu_custom_call.1']
    #allocation5 [shape = 'u8[131072]{0}', space=vmem, size = 0x20000, scoped, tag = 'input window, operand 1']
    #allocation6 [shape = 's32[2]{0}', space=sflag, size = 0x8, scoped, tag = 'scoped memory for tpu_custom_call.1']
    #allocation7 [shape = 'u8[8192]{0}', space=vmem, size = 0x2000, scoped, tag = 'output window, operand 0']
    %7 = vsyncpa [#allocation3], 0
    %8 = vsyncpa [#allocation6], 0
    %s9 = scalar_lea.sflag [#allocation6], 1
    %10 = vsyncpa %s9, 0
    %11 = vsyncpa [#allocation4], 0
    %s12 = scalar_lea.sflag [#allocation4], 1
    %13 = vsyncpa %s12, 0
    loop: start=0, step=1, limit=6
    $region2: #{tpu_custom_call.1} parent=1 // loop_pre_header
      _
    $region3: #{tpu_custom_call.1} parent=1 // loop_header
      %s15 = sphi 0, %s19
      %p16 = scmp.ge.s32.totalorder %s15, 6
      %s22 = sphi 0, %s34
      %s23 = sphi 0, %s30
      %s24 = sphi 0, %s22
      %s25 = sphi 0, %s23
      %s26 = sphi 0, %s24
      %s27 = sphi 0, %s25
      %s35 = sphi 0, %s35
      %s37 = sphi 0, %s35
      %s38 = sphi 0, %s37
      %s52 = sphi 0, %s38
      %s60 = sphi 0, %s62
      %s63 = sphi 0, %s60
      %s64 = sphi 0, %s63
      %s80 = sphi 0, %s64
      %s88 = sphi 0, %s90
      %s91 = sphi 0, %s88
      %s92 = sphi 0, %s91
      %s108 = sphi 0, %s92
    $region4: #{tpu_custom_call.1} parent=1 // loop_header_branch
      %18 = sbr.rel (%p16) target = $region8
    $region5: #{tpu_custom_call.1} parent=1 // loop_body
      %s20 = ssub.s32 %s15, 1
      %s21 = ssub.s32 %s15, 2
      %s28 = sadd.s32 1, %s23
      %p29 = scmp.ge.s32.totalorder %s28, 2
      %s30 = scalar_select %p29, 0, %s28
      %s31 = sadd.s32 1, %s22
      %s32 = scalar_select %p29, %s31, %s22
      %p33 = scmp.ge.s32.totalorder %s32, 2
      %s34 = scalar_select %p33, 0, %s32
      %s36 = sadd.s32 %s35, 1
      %p39 = scmp.eq.s32.totalorder %s15, 3
      %p40 = scmp.ne.s32.totalorder %s35, %s37
      %p41 = scmp.eq.s32.totalorder %s15, 0
      %p42 = por %p40, %p41
      %p43 = scmp.ne.s32.totalorder %s35, %s37
      %p44 = scmp.eq.s32.totalorder %s20, 3
      %p45 = por %p43, %p44
      %p46 = scmp.ne.s32.totalorder %s37, %s38
      %p47 = scmp.eq.s32.totalorder %s20, 0
      %p48 = por %p46, %p47
      %p49 = scmp.ne.s32.totalorder %s37, %s38
      %p50 = scmp.eq.s32.totalorder %s21, 3
      %p51 = por %p49, %p50
      %p53 = scmp.ne.s32.totalorder %s38, %s52
      %p54 = scmp.eq.s32.totalorder %s21, 0
      %p55 = por %p53, %p54
      %s56 = ssub.s32 %s22, %s34
      %s57 = ssub.s32 %s23, %s30
      %s58 = sor.u32 %s56, %s57
      %p59 = scmp.eq.s32.totalorder %s58, 0
      %s61 = sadd.s32 %s60, 1
      %s62 = scalar_select %p59, %s60, %s61
      %p65 = pneg %p59
      %p66 = scmp.eq.s32.totalorder %s15, 3
      %p67 = por %p65, %p66
      %p68 = scmp.ne.s32.totalorder %s60, %s63
      %p69 = scmp.eq.s32.totalorder %s15, 0
      %p70 = por %p68, %p69
      %p71 = scmp.ne.s32.totalorder %s60, %s63
      %p72 = scmp.eq.s32.totalorder %s20, 3
      %p73 = por %p71, %p72
      %p74 = scmp.ne.s32.totalorder %s63, %s64
      %p75 = scmp.eq.s32.totalorder %s20, 0
      %p76 = por %p74, %p75
      %p77 = scmp.ne.s32.totalorder %s63, %s64
      %p78 = scmp.eq.s32.totalorder %s21, 3
      %p79 = por %p77, %p78
      %p81 = scmp.ne.s32.totalorder %s64, %s80
      %p82 = scmp.eq.s32.totalorder %s21, 0
      %p83 = por %p81, %p82
      %s84 = ssub.s32 %s22, %s34
      %s85 = ssub.s32 %s23, %s30
      %s86 = sor.u32 %s84, %s85
      %p87 = scmp.eq.s32.totalorder %s86, 0
      %s89 = sadd.s32 %s88, 1
      %s90 = scalar_select %p87, %s88, %s89
      %p93 = pneg %p87
      %p94 = scmp.eq.s32.totalorder %s15, 3
      %p95 = por %p93, %p94
      %p96 = scmp.ne.s32.totalorder %s88, %s91
      %p97 = scmp.eq.s32.totalorder %s15, 0
      %p98 = por %p96, %p97
      %p99 = scmp.ne.s32.totalorder %s88, %s91
      %p100 = scmp.eq.s32.totalorder %s20, 3
      %p101 = por %p99, %p100
      %p102 = scmp.ne.s32.totalorder %s91, %s92
      %p103 = scmp.eq.s32.totalorder %s20, 0
      %p104 = por %p102, %p103
      %p105 = scmp.ne.s32.totalorder %s91, %s92
      %p106 = scmp.eq.s32.totalorder %s21, 3
      %p107 = por %p105, %p106
      %p109 = scmp.ne.s32.totalorder %s92, %s108
      %p110 = scmp.eq.s32.totalorder %s21, 0
      %p111 = por %p109, %p110
      %p112 = scmp.le.s32.totalorder 1, %s15
      %p113 = scmp.lt.s32.totalorder %s15, 5
      %p114 = pnand %p112, %p113
      %p115 = pneg %p114
      // Predicated region
      $region9: #{tpu_custom_call.1} parent=5 // pred_check
        _
      $region10: #{tpu_custom_call.1} parent=5 // pred_check_branch
        %117 = sbr.rel (%p114) target = $region12
      $region11: #{tpu_custom_call.1} parent=5 // pred_region
        %s118 = ssub.s32 %s15, 1
        // Predicated region
        $region13: #{tpu_custom_call.1} parent=11 // pred_check
          %p119 = pneg %p48
        $region14: #{tpu_custom_call.1} parent=11 // pred_check_branch
          %121 = sbr.rel (%p119) target = $region16
        $region15: #{tpu_custom_call.1} parent=11 // pred_region
          %s123 = ssub.s32 512, 512
          %124 = vsyncadd [#allocation3], %s123
          %s125 = sshll.u32 [#allocation2], 4
          %s126 = int_to_ptr.vmem [resolvable:$true] %s125
          %131 = dma.hbm_to_vmem [thread:$0]  %s0, 512, %s126, [#allocation3], 256, 256, 16
        $region16: #{tpu_custom_call.1} parent=11 // pred_fallthru
          _
      $region12: #{tpu_custom_call.1} parent=5 // pred_fallthru
        _
      %p132 = scmp.lt.s32.totalorder %s15, 4
      // Predicated region
      $region17: #{tpu_custom_call.1} parent=5 // pred_check
        %p133 = pneg %p132
      $region18: #{tpu_custom_call.1} parent=5 // pred_check_branch
        %135 = sbr.rel (%p133) target = $region20
      $region19: #{tpu_custom_call.1} parent=5 // pred_region
        // Predicated region
        $region21: #{tpu_custom_call.1} parent=19 // pred_check
          %p136 = pneg %p70
        $region22: #{tpu_custom_call.1} parent=19 // pred_check_branch
          %138 = sbr.rel (%p136) target = $region24
        $region23: #{tpu_custom_call.1} parent=19 // pred_region
          %s139 = sand.u32 %s60, 1
          %s140 = scalar_lea.sflag [#allocation6], %s139
          %s141 = sand.u32 %s60, 1
          %s142 = smul.addr %s141, 128
          %s143 = scalar_lea.vmem [#allocation5], %s142
          %s144 = smul.u32 2, %s23
          %s146 = ssub.s32 2048, 2048
          %147 = vsyncadd %s140, %s146
          %s148 = smul.addr %s22, 32
          %s149 = sadd.s32 %s144, %s148
          %s150 = smul.addr %s149, 128
          %s151 = scalar_lea.hbm %s1, %s150
          %s152 = sshll.u32 %s143, 4
          %s153 = int_to_ptr.vmem [resolvable:$true] %s152
          %158 = dma.hbm_to_vmem [thread:$0]  %s151, 2048, %s153, %s140, 512, 256, 16
        $region24: #{tpu_custom_call.1} parent=19 // pred_fallthru
          _
      $region20: #{tpu_custom_call.1} parent=5 // pred_fallthru
        _
      %p159 = scmp.le.s32.totalorder 1, %s15
      %p160 = scmp.lt.s32.totalorder %s15, 5
      %p161 = pnand %p159, %p160
      %p162 = pneg %p161
      // Predicated region
      $region25: #{tpu_custom_call.1} parent=5 // pred_check
        _
      $region26: #{tpu_custom_call.1} parent=5 // pred_check_branch
        %164 = sbr.rel (%p161) target = $region28
      $region27: #{tpu_custom_call.1} parent=5 // pred_region
        %s165 = ssub.s32 %s15, 1
        // Predicated region
        $region29: #{tpu_custom_call.1} parent=27 // pred_check
          %p166 = pneg %p48
        $region30: #{tpu_custom_call.1} parent=27 // pred_check_branch
          %168 = sbr.rel (%p166) target = $region32
        $region31: #{tpu_custom_call.1} parent=27 // pred_region
          %169 = dma.done [#allocation3], 512
        $region32: #{tpu_custom_call.1} parent=27 // pred_fallthru
          _
        %s170 = sand.u32 %s63, 1
        %s171 = scalar_lea.sflag [#allocation6], %s170
        %s172 = sand.u32 %s63, 1
        %s173 = smul.addr %s172, 128
        %s174 = scalar_lea.vmem [#allocation5], %s173
        // Predicated region
        $region33: #{tpu_custom_call.1} parent=27 // pred_check
          %p175 = pneg %p76
        $region34: #{tpu_custom_call.1} parent=27 // pred_check_branch
          %177 = sbr.rel (%p175) target = $region36
        $region35: #{tpu_custom_call.1} parent=27 // pred_region
          %178 = dma.done %s171, 2048
        $region36: #{tpu_custom_call.1} parent=27 // pred_fallthru
          _
        %p179 = pneg %p48
        %p180 = pneg %p45
        %s181 = sand.u32 %s63, 1
        %s182 = scalar_lea.sflag [#allocation6], %s181
        %s183 = sand.u32 %s63, 1
        %s184 = smul.addr %s183, 128
        %s185 = scalar_lea.vmem [#allocation5], %s184
        %p186 = pneg %p76
        %p187 = pneg %p73
        %p188 = pneg %p104
        %p189 = pneg %p101
        %s190 = sand.u32 %s91, 1
        %s191 = scalar_lea.sflag [#allocation4], %s190
        %s192 = sand.u32 %s91, 1
        %s193 = smul.addr %s192, 8
        %s194 = scalar_lea.vmem [#allocation7], %s193
        %s195 = smul.u32 2, %s25
        %s196 = smul.u32 2, %s25
        %v197 = vld [vmem:[%s174] sm:$0xff]
        %v198 = vld [vmem:[%s174 + $0x8] sm:$0xff]
        %v199 = vld [vmem:[%s174 + $0x10] sm:$0xff]
        %v200 = vld [vmem:[%s174 + $0x18] sm:$0xff]
        %v201 = vld [vmem:[%s174 + $0x20] sm:$0xff]
        %v202 = vld [vmem:[%s174 + $0x28] sm:$0xff]
        %v203 = vld [vmem:[%s174 + $0x30] sm:$0xff]
        %v204 = vld [vmem:[%s174 + $0x38] sm:$0xff]
        %v205 = vld [vmem:[%s174 + $0x40] sm:$0xff]
        %v206 = vld [vmem:[%s174 + $0x48] sm:$0xff]
        %v207 = vld [vmem:[%s174 + $0x50] sm:$0xff]
        %v208 = vld [vmem:[%s174 + $0x58] sm:$0xff]
        %v209 = vld [vmem:[%s174 + $0x60] sm:$0xff]
        %v210 = vld [vmem:[%s174 + $0x68] sm:$0xff]
        %v211 = vld [vmem:[%s174 + $0x70] sm:$0xff]
        %v212 = vld [vmem:[%s174 + $0x78] sm:$0xff]
        %v213 = vmax.f32 %v197, %v199
        %v214 = vrot.slane %v213, 4
        %v215 = vmax.f32 %v213, %v214
        %v216 = vrot.slane %v215, 2
        %v217 = vmax.f32 %v215, %v216
        %v218 = vrot.slane %v217, 1
        %v219 = vmax.f32 %v217, %v218
        %v220 = vmax.f32 %v198, %v200
        %v221 = vrot.slane %v220, 4
        %v222 = vmax.f32 %v220, %v221
        %v223 = vrot.slane %v222, 2
        %v224 = vmax.f32 %v222, %v223
        %v225 = vrot.slane %v224, 1
        %v226 = vmax.f32 %v224, %v225
        %v227 = vmax.f32 %v201, %v203
        %v228 = vrot.slane %v227, 4
        %v229 = vmax.f32 %v227, %v228
        %v230 = vrot.slane %v229, 2
        %v231 = vmax.f32 %v229, %v230
        %v232 = vrot.slane %v231, 1
        %v233 = vmax.f32 %v231, %v232
        %v234 = vmax.f32 %v202, %v204
        %v235 = vrot.slane %v234, 4
        %v236 = vmax.f32 %v234, %v235
        %v237 = vrot.slane %v236, 2
        %v238 = vmax.f32 %v236, %v237
        %v239 = vrot.slane %v238, 1
        %v240 = vmax.f32 %v238, %v239
        %v241 = vmax.f32 %v205, %v207
        %v242 = vrot.slane %v241, 4
        %v243 = vmax.f32 %v241, %v242
        %v244 = vrot.slane %v243, 2
        %v245 = vmax.f32 %v243, %v244
        %v246 = vrot.slane %v245, 1
        %v247 = vmax.f32 %v245, %v246
        %v248 = vmax.f32 %v206, %v208
        %v249 = vrot.slane %v248, 4
        %v250 = vmax.f32 %v248, %v249
        %v251 = vrot.slane %v250, 2
        %v252 = vmax.f32 %v250, %v251
        %v253 = vrot.slane %v252, 1
        %v254 = vmax.f32 %v252, %v253
        %v255 = vmax.f32 %v209, %v211
        %v256 = vrot.slane %v255, 4
        %v257 = vmax.f32 %v255, %v256
        %v258 = vrot.slane %v257, 2
        %v259 = vmax.f32 %v257, %v258
        %v260 = vrot.slane %v259, 1
        %v261 = vmax.f32 %v259, %v260
        %v262 = vmax.f32 %v210, %v212
        %v263 = vrot.slane %v262, 4
        %v264 = vmax.f32 %v262, %v263
        %v265 = vrot.slane %v264, 2
        %v266 = vmax.f32 %v264, %v265
        %v267 = vrot.slane %v266, 1
        %v268 = vmax.f32 %v266, %v267
        %v269 = vsub.f32 %v197, %v219
        %v270 = vsub.f32 %v198, %v226
        %v271 = vsub.f32 %v199, %v219
        %v272 = vsub.f32 %v200, %v226
        %v273 = vsub.f32 %v201, %v233
        %v274 = vsub.f32 %v202, %v240
        %v275 = vsub.f32 %v203, %v233
        %v276 = vsub.f32 %v204, %v240
        %v277 = vsub.f32 %v205, %v247
        %v278 = vsub.f32 %v206, %v254
        %v279 = vsub.f32 %v207, %v247
        %v280 = vsub.f32 %v208, %v254
        %v281 = vsub.f32 %v209, %v261
        %v282 = vsub.f32 %v210, %v268
        %v283 = vsub.f32 %v211, %v261
        %v284 = vsub.f32 %v212, %v268
        %v285 = vmul.f32 %v269, 1.442695
        %v286 = vpow.pop %v285
        %v287 = vmul.f32 %v270, 1.442695
        %v288 = vpow.pop %v287
        %v289 = vmul.f32 %v271, 1.442695
        %v290 = vpow.pop %v289
        %v291 = vmul.f32 %v272, 1.442695
        %v292 = vpow.pop %v291
        %v293 = vmul.f32 %v273, 1.442695
        %v294 = vpow.pop %v293
        %v295 = vmul.f32 %v274, 1.442695
        %v296 = vpow.pop %v295
        %v297 = vmul.f32 %v275, 1.442695
        %v298 = vpow.pop %v297
        %v299 = vmul.f32 %v276, 1.442695
        %v300 = vpow.pop %v299
        %v301 = vmul.f32 %v277, 1.442695
        %v302 = vpow.pop %v301
        %v303 = vmul.f32 %v278, 1.442695
        %v304 = vpow.pop %v303
        %v305 = vmul.f32 %v279, 1.442695
        %v306 = vpow.pop %v305
        %v307 = vmul.f32 %v280, 1.442695
        %v308 = vpow.pop %v307
        %v309 = vmul.f32 %v281, 1.442695
        %v310 = vpow.pop %v309
        %v311 = vmul.f32 %v282, 1.442695
        %v312 = vpow.pop %v311
        %v313 = vmul.f32 %v283, 1.442695
        %v314 = vpow.pop %v313
        %v315 = vmul.f32 %v284, 1.442695
        %v316 = vpow.pop %v315
        %v317 = vadd.f32 %v286, %v290
        %v318 = vrot.slane %v317, 4
        %v319 = vadd.f32 %v317, %v318
        %v320 = vrot.slane %v319, 2
        %v321 = vadd.f32 %v319, %v320
        %v322 = vrot.slane %v321, 1
        %v323 = vadd.f32 %v321, %v322
        %v324 = vadd.f32 %v288, %v292
        %v325 = vrot.slane %v324, 4
        %v326 = vadd.f32 %v324, %v325
        %v327 = vrot.slane %v326, 2
        %v328 = vadd.f32 %v326, %v327
        %v329 = vrot.slane %v328, 1
        %v330 = vadd.f32 %v328, %v329
        %v331 = vadd.f32 %v294, %v298
        %v332 = vrot.slane %v331, 4
        %v333 = vadd.f32 %v331, %v332
        %v334 = vrot.slane %v333, 2
        %v335 = vadd.f32 %v333, %v334
        %v336 = vrot.slane %v335, 1
        %v337 = vadd.f32 %v335, %v336
        %v338 = vadd.f32 %v296, %v300
        %v339 = vrot.slane %v338, 4
        %v340 = vadd.f32 %v338, %v339
        %v341 = vrot.slane %v340, 2
        %v342 = vadd.f32 %v340, %v341
        %v343 = vrot.slane %v342, 1
        %v344 = vadd.f32 %v342, %v343
        %v345 = vadd.f32 %v302, %v306
        %v346 = vrot.slane %v345, 4
        %v347 = vadd.f32 %v345, %v346
        %v348 = vrot.slane %v347, 2
        %v349 = vadd.f32 %v347, %v348
        %v350 = vrot.slane %v349, 1
        %v351 = vadd.f32 %v349, %v350
        %v352 = vadd.f32 %v304, %v308
        %v353 = vrot.slane %v352, 4
        %v354 = vadd.f32 %v352, %v353
        %v355 = vrot.slane %v354, 2
        %v356 = vadd.f32 %v354, %v355
        %v357 = vrot.slane %v356, 1
        %v358 = vadd.f32 %v356, %v357
        %v359 = vadd.f32 %v310, %v314
        %v360 = vrot.slane %v359, 4
        %v361 = vadd.f32 %v359, %v360
        %v362 = vrot.slane %v361, 2
        %v363 = vadd.f32 %v361, %v362
        %v364 = vrot.slane %v363, 1
        %v365 = vadd.f32 %v363, %v364
        %v366 = vadd.f32 %v312, %v316
        %v367 = vrot.slane %v366, 4
        %v368 = vadd.f32 %v366, %v367
        %v369 = vrot.slane %v368, 2
        %v370 = vadd.f32 %v368, %v369
        %v371 = vrot.slane %v370, 1
        %v372 = vadd.f32 %v370, %v371
        %v373 = vld [vmem:[#allocation2] sm:$0xff]
        %v374 = vld [vmem:[#allocation2 + $0x8] sm:$0xff]
        %v375 = vld [vmem:[#allocation2 + $0x10] sm:$0xff]
        %v376 = vld [vmem:[#allocation2 + $0x18] sm:$0xff]
        %v377 = vmul.f32 %v286, %v373
        %v378 = vmul.f32 %v288, %v374
        %v379 = vmul.f32 %v290, %v375
        %v380 = vmul.f32 %v292, %v376
        %v381 = vmul.f32 %v294, %v373
        %v382 = vmul.f32 %v296, %v374
        %v383 = vmul.f32 %v298, %v375
        %v384 = vmul.f32 %v300, %v376
        %v385 = vmul.f32 %v302, %v373
        %v386 = vmul.f32 %v304, %v374
        %v387 = vmul.f32 %v306, %v375
        %v388 = vmul.f32 %v308, %v376
        %v389 = vmul.f32 %v310, %v373
        %v390 = vmul.f32 %v312, %v374
        %v391 = vmul.f32 %v314, %v375
        %v392 = vmul.f32 %v316, %v376
        %v393 = vadd.f32 %v377, %v379
        %v394 = vrot.slane %v393, 4
        %v395 = vadd.f32 %v393, %v394
        %v396 = vrot.slane %v395, 2
        %v397 = vadd.f32 %v395, %v396
        %v398 = vrot.slane %v397, 1
        %v399 = vadd.f32 %v397, %v398
        %v400 = vadd.f32 %v378, %v380
        %v401 = vrot.slane %v400, 4
        %v402 = vadd.f32 %v400, %v401
        %v403 = vrot.slane %v402, 2
        %v404 = vadd.f32 %v402, %v403
        %v405 = vrot.slane %v404, 1
        %v406 = vadd.f32 %v404, %v405
        %v407 = vadd.f32 %v381, %v383
        %v408 = vrot.slane %v407, 4
        %v409 = vadd.f32 %v407, %v408
        %v410 = vrot.slane %v409, 2
        %v411 = vadd.f32 %v409, %v410
        %v412 = vrot.slane %v411, 1
        %v413 = vadd.f32 %v411, %v412
        %v414 = vadd.f32 %v382, %v384
        %v415 = vrot.slane %v414, 4
        %v416 = vadd.f32 %v414, %v415
        %v417 = vrot.slane %v416, 2
        %v418 = vadd.f32 %v416, %v417
        %v419 = vrot.slane %v418, 1
        %v420 = vadd.f32 %v418, %v419
        %v421 = vadd.f32 %v385, %v387
        %v422 = vrot.slane %v421, 4
        %v423 = vadd.f32 %v421, %v422
        %v424 = vrot.slane %v423, 2
        %v425 = vadd.f32 %v423, %v424
        %v426 = vrot.slane %v425, 1
        %v427 = vadd.f32 %v425, %v426
        %v428 = vadd.f32 %v386, %v388
        %v429 = vrot.slane %v428, 4
        %v430 = vadd.f32 %v428, %v429
        %v431 = vrot.slane %v430, 2
        %v432 = vadd.f32 %v430, %v431
        %v433 = vrot.slane %v432, 1
        %v434 = vadd.f32 %v432, %v433
        %v435 = vadd.f32 %v389, %v391
        %v436 = vrot.slane %v435, 4
        %v437 = vadd.f32 %v435, %v436
        %v438 = vrot.slane %v437, 2
        %v439 = vadd.f32 %v437, %v438
        %v440 = vrot.slane %v439, 1
        %v441 = vadd.f32 %v439, %v440
        %v442 = vadd.f32 %v390, %v392
        %v443 = vrot.slane %v442, 4
        %v444 = vadd.f32 %v442, %v443
        %v445 = vrot.slane %v444, 2
        %v446 = vadd.f32 %v444, %v445
        %v447 = vrot.slane %v446, 1
        %v448 = vadd.f32 %v446, %v447
        %v449 = vrcp.pop %v323
        %v450 = vmul.f32 %v399, %v449
        %v451 = vrcp.pop %v330
        %v452 = vmul.f32 %v406, %v451
        %v453 = vrcp.pop %v337
        %v454 = vmul.f32 %v413, %v453
        %v455 = vrcp.pop %v344
        %v456 = vmul.f32 %v420, %v455
        %v457 = vrcp.pop %v351
        %v458 = vmul.f32 %v427, %v457
        %v459 = vrcp.pop %v358
        %v460 = vmul.f32 %v434, %v459
        %v461 = vrcp.pop %v365
        %v462 = vmul.f32 %v441, %v461
        %v463 = vrcp.pop %v372
        %v464 = vmul.f32 %v448, %v463
        %v473 = vcombine.low %v450, %v452
        %v474 = vcombine.low %v454, %v456
        %v475 = vcombine.low %v458, %v460
        %v476 = vcombine.low %v462, %v464
        %v477 = vrot.slane %v474, 7
        %vm478 = vcmask 1041409
        %v479 = vsel %vm478, %v477, %v473
        %vm480 = vcmask 1045509
        %v481 = vsel %vm480, %v477, %v479
        %v482 = vrot.slane %v475, 6
        %vm483 = vcmask 1042434
        %v484 = vsel %vm483, %v482, %v481
        %vm485 = vcmask 1046534
        %v486 = vsel %vm485, %v482, %v484
        %v487 = vrot.slane %v476, 5
        %vm488 = vcmask 1043459
        %v489 = vsel %vm488, %v487, %v486
        %vm490 = vcmask 1047559
        %v491 = vsel %vm490, %v487, %v489
        %493 = vst [vmem:[%s194] sm:$0xff] %v491
        %s494 = sand.u32 %s91, 1
        %s495 = scalar_lea.sflag [#allocation4], %s494
        %s496 = sand.u32 %s91, 1
        %s497 = smul.addr %s496, 8
        %s498 = scalar_lea.vmem [#allocation7], %s497
        // Predicated region
        $region37: #{tpu_custom_call.1} parent=27 // pred_check
          %p499 = pneg %p101
        $region38: #{tpu_custom_call.1} parent=27 // pred_check_branch
          %501 = sbr.rel (%p499) target = $region40
        $region39: #{tpu_custom_call.1} parent=27 // pred_region
          %s502 = smul.u32 2, %s25
          %s504 = ssub.s32 128, 128
          %505 = vsyncadd %s495, %s504
          %s506 = smul.addr %s24, 4
          %s507 = sadd.s32 %s502, %s506
          %s508 = smul.addr %s507, 64
          %s509 = scalar_lea.hbm %s2, %s508
          %s511 = sshll.u32 %s498, 4
          %s512 = int_to_ptr.vmem [resolvable:$true] %s511
          %514 = dma.vmem_to_hbm [thread:$0]  %s512, 128, %s509, %s495
        $region40: #{tpu_custom_call.1} parent=27 // pred_fallthru
          _
      $region28: #{tpu_custom_call.1} parent=5 // pred_fallthru
        _
      %p515 = scmp.le.s32.totalorder 2, %s15
      // Predicated region
      $region41: #{tpu_custom_call.1} parent=5 // pred_check
        %p516 = pneg %p515
      $region42: #{tpu_custom_call.1} parent=5 // pred_check_branch
        %518 = sbr.rel (%p516) target = $region44
      $region43: #{tpu_custom_call.1} parent=5 // pred_region
        %s519 = ssub.s32 %s15, 2
        // Predicated region
        $region45: #{tpu_custom_call.1} parent=43 // pred_check
          %p520 = pneg %p107
        $region46: #{tpu_custom_call.1} parent=43 // pred_check_branch
          %522 = sbr.rel (%p520) target = $region48
        $region47: #{tpu_custom_call.1} parent=43 // pred_region
          %s523 = sand.u32 %s92, 1
          %s524 = scalar_lea.sflag [#allocation4], %s523
          %s525 = sand.u32 %s92, 1
          %s526 = smul.addr %s525, 8
          %s527 = scalar_lea.vmem [#allocation7], %s526
          %528 = dma.done %s524, 128
        $region48: #{tpu_custom_call.1} parent=43 // pred_fallthru
          _
      $region44: #{tpu_custom_call.1} parent=5 // pred_fallthru
        _
    $region6: #{tpu_custom_call.1} parent=1 // loop_footer
      %s19 = sadd.s32 1, %s15
    $region7: #{tpu_custom_call.1} parent=1 // loop_footer_branch
      %14 = sbr.rel target = $region3
    $region8: #{tpu_custom_call.1} parent=1 // loop_exit
      _
    %529 = vsyncpa [#allocation3], 1
    %s530 = scalar_lea.sflag [#allocation3], 1
    %531 = vsyncpa %s530, 1
    %532 = vsyncpa [#allocation6], 1
    %s533 = scalar_lea.sflag [#allocation6], 1
    %534 = vsyncpa %s533, 1
    %535 = vsyncpa [#allocation4], 1
    %s536 = scalar_lea.sflag [#allocation4], 1
    %537 = vsyncpa %s536, 1

</llo_original>
